<compile_context>
chip_gen: v6e
topology: v6e:2x2x1
jax: 0.10.0
libtpu: 0.0.40
codegen_flags: <defaults>
</compile_context>

<pallas_src>
import functools

import jax
import jax.numpy as jnp
from jax import lax
from jax.experimental import pallas as pl
from jax.experimental.pallas import tpu as pltpu


def _denom_kernel(rows_ref, cols_ref, denom_ref, *, inv_t):
    """Accumulate per-row sum_k exp(sim[r, k]/T - 1/T) over column tiles."""
    c = pl.program_id(1)

    @pl.when(c == 0)
    def _init():
        denom_ref[...] = jnp.zeros_like(denom_ref)

    # (row_tile, Dp) x (col_tile, Dp) contracted on the last dims -> sim/T
    # (operands already carry a sqrt(1/T) factor each).  MXU, f32 accumulate.
    s = lax.dot_general(rows_ref[...], cols_ref[...],
                        (((1,), (1,)), ((), ())),
                        preferred_element_type=jnp.float32)
    # shift by the largest possible logit (1/T) before exp: overflow-safe.
    denom_ref[...] += jnp.sum(jnp.exp(s - inv_t), axis=1, keepdims=True)


def contrastive_loss_eli5(emb_i, emb_j, temperature=0.5, use_bf16_matmul=False):
    assert emb_i.shape == emb_j.shape and emb_i.ndim == 2
    B, D = emb_i.shape
    M = 2 * B
    inv_t = 1.0 / float(temperature)
    scale = float(temperature) ** -0.5  # sqrt(1/T), folded into both operands

    # ---------------- XLA prologue (memory-bound, O(2B*D)) ----------------
    def normalize(x):
        x = x.astype(jnp.float32)
        ss = jnp.sum(x * x, axis=1, keepdims=True)
        return x * lax.rsqrt(jnp.maximum(ss, 1e-24))

    zi = normalize(emb_i)
    zj = normalize(emb_j)
    pos = jnp.sum(zi * zj, axis=1) * inv_t               # (B,)  sim(z_i,z_j)/T
    reps = jnp.concatenate([zi, zj], axis=0) * scale      # (M, D), carries sqrt(1/T)
    # exact diagonal term exp(sim_ii/T - 1/T) (robust to |z_i| != 1 rounding
    # and to all-zero embedding rows).
    diag = jnp.exp(jnp.sum(reps * reps, axis=1) - inv_t)  # (M,)

    # lane/MXU-friendly padding: features to x256, rows to x128 (zero rows).
    Dp = max(256, -(-D // 256) * 256)
    Mp = max(128, -(-M // 128) * 128)
    reps_p = jnp.zeros((Mp, Dp), jnp.float32).at[:M, :D].set(reps)
    n_col_pad = Mp - M  # each padded (zero) column adds exactly exp(-1/T)

    if use_bf16_matmul:
        # cast once here (not per grid step); accumulation stays f32.
        reps_p = reps_p.astype(jnp.bfloat16)

    # ---------------- tiling / VMEM budget --------------------------------
    col_tile = next(t for t in (512, 256, 128) if Mp % t == 0)
    row_tile = next(t for t in (256, 128) if Mp % t == 0)
    grid = (Mp // row_tile, Mp // col_tile)

    itemsize = 2 if use_bf16_matmul else 4
    need = (2 * row_tile * Dp * itemsize        # double-buffered LHS rows
            + 2 * col_tile * Dp * itemsize      # double-buffered RHS cols
            + 2 * row_tile * 128 * 4            # lane-padded (row_tile,1) output
            + 4 * row_tile * col_tile * 4)      # dot result + exp temporaries
    try:
        phys = pltpu.get_tpu_info().vmem_capacity_bytes
    except Exception:
        phys = 64 * 2**20                       # conservative (v7x per-core)
    cap = max(32 * 2**20, phys - 12 * 2**20)    # headroom for Mosaic internals
    vmem_bytes = int(min(cap, max(32 * 2**20, 2 * need)))

    kernel = functools.partial(_denom_kernel, inv_t=inv_t)

    denom = pl.pallas_call(
        kernel,
        out_shape=jax.ShapeDtypeStruct((Mp, 1), jnp.float32),
        grid_spec=pltpu.PrefetchScalarGridSpec(
            num_scalar_prefetch=0,
            grid=grid,
            in_specs=[
                pl.BlockSpec((row_tile, Dp), lambda r, c: (r, 0)),  # LHS row tile
                pl.BlockSpec((col_tile, Dp), lambda r, c: (c, 0)),  # RHS col tile
            ],
            out_specs=pl.BlockSpec((row_tile, 1), lambda r, c: (r, 0)),
        ),
        compiler_params=pltpu.CompilerParams(
            dimension_semantics=("parallel", "arbitrary"),
            vmem_limit_bytes=vmem_bytes,
        ),
    )(reps_p, reps_p)

    # ---------------- XLA epilogue (O(2B)) ---------------------------------
    denom = denom[:M, 0]
    denom = denom - diag - n_col_pad * jnp.exp(-inv_t)   # drop diag + padding
    pos2 = jnp.concatenate([pos, pos], axis=0)           # rows k and k+B share sim_pos
    loss_rows = -pos2 + inv_t + jnp.log(denom)           # -sim_pos/T + log sum exp(sim/T)
    return jnp.sum(loss_rows) / (2.0 * B)


def _reference(emb_i, emb_j, temperature=0.5):
    # Pure-JAX reference mirroring the PyTorch loop semantics.
    def normalize(x):
        n = jnp.maximum(jnp.linalg.norm(x, axis=1, keepdims=True), 1e-12)
        return x / n

    B = emb_i.shape[0]
    reps = jnp.concatenate([normalize(emb_i), normalize(emb_j)], axis=0)
    sim = reps @ reps.T
    total = 0.0
    for k in range(B):
        for (i, j) in ((k, k + B), (k + B, k)):
            num = jnp.exp(sim[i, j] / temperature)
            mask = jnp.ones((2 * B,)).at[i].set(0.0)
            den = jnp.sum(mask * jnp.exp(sim[i, :] / temperature))
            total = total + (-jnp.log(num / den))
    return total / (2.0 * B)


if __name__ == "__main__":
    key = jax.random.PRNGKey(0)
    k1, k2 = jax.random.split(key)
    batch_size, hidden = 8, 32
    emb_i = jax.random.normal(k1, (batch_size, hidden), dtype=jnp.float32)
    emb_j = jax.random.normal(k2, (batch_size, hidden), dtype=jnp.float32)

    loss = contrastive_loss_eli5(emb_i, emb_j, temperature=0.5)
    loss = jax.block_until_ready(loss)

    ref = _reference(emb_i, emb_j, temperature=0.5)
    assert jnp.allclose(loss, ref, rtol=1e-5, atol=1e-5), (loss, ref)

    print("KERNEL_OK")
</pallas_src>

<mosaic_0001>
module attributes {stable_mosaic.version = 11 : i64} {
  func.func @_denom_kernel(%arg0: i32, %arg1: i32, %arg2: memref<128x256xf32, #tpu.memory_space<vmem>>, %arg3: memref<128x256xf32, #tpu.memory_space<vmem>>, %arg4: memref<128x1xf32, #tpu.memory_space<vmem>>) attributes {dimension_semantics = [#tpu.dimension_semantics<parallel>, #tpu.dimension_semantics<arbitrary>], iteration_bounds = array<i64: 1, 1>, scalar_prefetch = 0 : i64, scratch_operands = 0 : i64, tpu.core_type = #tpu.core_type<tc>, window_params = [{transform_indices = @transform_0, window_bounds = array<i64: 128, 256>}, {transform_indices = @transform_1, window_bounds = array<i64: 128, 256>}, {transform_indices = @transform_2, window_bounds = array<i64: 128, 1>}]} {
    %c0_i32 = arith.constant 0 : i32
    %0 = arith.cmpi eq, %arg1, %c0_i32 : i32
    %1 = arith.extui %0 : i1 to i32
    %c0_i32_0 = arith.constant 0 : i32
    %2 = arith.cmpi ne, %1, %c0_i32_0 : i32
    scf.if %2 {
      %cst_10 = arith.constant 0.000000e+00 : f32
      %14 = vector.broadcast %cst_10 : f32 to vector<128x1xf32>
      %c0_11 = arith.constant 0 : index
      %c0_12 = arith.constant 0 : index
      %15 = vector.load %arg4[%c0_11, %c0_12] : memref<128x1xf32, #tpu.memory_space<vmem>>, vector<128x1xf32>
      tpu.vector_store %arg4[%c0_11, %c0_12], %14 {strides = array<i32>} : memref<128x1xf32, #tpu.memory_space<vmem>>, vector<128x1xf32>,
    } else {
    }
    %c0 = arith.constant 0 : index
    %c0_1 = arith.constant 0 : index
    %3 = vector.load %arg2[%c0, %c0_1] : memref<128x256xf32, #tpu.memory_space<vmem>>, vector<128x256xf32>
    %c0_2 = arith.constant 0 : index
    %c0_3 = arith.constant 0 : index
    %4 = vector.load %arg3[%c0_2, %c0_3] : memref<128x256xf32, #tpu.memory_space<vmem>>, vector<128x256xf32>
    %cst = arith.constant dense<0.000000e+00> : vector<128x128xf32>
    %5 = tpu.matmul %3, %4, %cst {dimension_numbers = #tpu.dot_dimension_numbers<[1], [1], [0], [0], [0, 0, 1, 0], [], []>} : vector<128x256xf32>, vector<128x256xf32>, vector<128x128xf32> -> vector<128x128xf32>
    %c0_4 = arith.constant 0 : index
    %c0_5 = arith.constant 0 : index
    %6 = vector.load %arg4[%c0_4, %c0_5] : memref<128x1xf32, #tpu.memory_space<vmem>>, vector<128x1xf32>
    %cst_6 = arith.constant 2.000000e+00 : f32
    %7 = vector.broadcast %cst_6 : f32 to vector<128x128xf32>
    %8 = arith.subf %5, %7 : vector<128x128xf32>
    %9 = math.exp %8 : vector<128x128xf32>
    %cst_7 = arith.constant dense<0.000000e+00> : vector<128xf32>
    %10 = vector.multi_reduction <add>, %9, %cst_7 [1] : vector<128x128xf32> to vector<128xf32>
    %11 = vector.shape_cast %10 : vector<128xf32> to vector<128x1xf32>
    %12 = arith.addf %6, %11 : vector<128x1xf32>
    %c0_8 = arith.constant 0 : index
    %c0_9 = arith.constant 0 : index
    %13 = vector.load %arg4[%c0_8, %c0_9] : memref<128x1xf32, #tpu.memory_space<vmem>>, vector<128x1xf32>
    tpu.vector_store %arg4[%c0_8, %c0_9], %12 {strides = array<i32>} : memref<128x1xf32, #tpu.memory_space<vmem>>, vector<128x1xf32>,
    return
  }
  func.func @transform_0(%arg0: i32, %arg1: i32) -> (i32, i32) {
    %c0_i32 = arith.constant 0 : i32
    %c0_i32_0 = arith.constant 0 : i32
    return %arg0, %c0_i32 : i32, i32
  }
  func.func @transform_1(%arg0: i32, %arg1: i32) -> (i32, i32) {
    %c0_i32 = arith.constant 0 : i32
    %c0_i32_0 = arith.constant 0 : i32
    return %arg1, %c0_i32 : i32, i32
  }
  func.func @transform_2(%arg0: i32, %arg1: i32) -> (i32, i32) {
    %c0_i32 = arith.constant 0 : i32
    %c0_i32_0 = arith.constant 0 : i32
    return %arg0, %c0_i32 : i32, i32
  }
}

</mosaic_0001>

<llo_original>
// kernel: tpu_custom_call.1
$region0: #{tpu_custom_call.1}
  #allocation0 [shape = 'u32[]', space=smem, size = 0x4, offset = 0x4, fixed_abs, tag = 'smem constant byte address 0x4 - core index']
  #allocation1 [shape = 'u32[144,128]{1,0:T(1,128)}', space=vmem, size = 0x12000, scoped, tag = 'internal scratch']
  %s0 = inlined_call_operand.hbm [shape: f32[128,256], index: 0, kind: input, shape index: {}]
  %s1 = inlined_call_operand.hbm [shape: f32[128,256], index: 1, kind: input, shape index: {}]
  %s2 = inlined_call_operand.vmem [shape: f32[128,1], index: 2, kind: output, shape index: {}]
  %s3 = sld [smem:[#allocation0]]
  $region30: #{tpu_custom_call.1} parent=0
    _
  %s5 = ssub.s32 1, %s3
  %s6 = scalar_select 0, %s5, %s3
  $region1: #{tpu_custom_call.1} parent=0
    #allocation2 [shape = 'u8[131072]{0}', space=vmem, size = 0x20000, scoped, tag = 'input window, operand 0, single buffered']
    #allocation3 [shape = 's32[1]{0}', space=sflag, size = 0x4, scoped, tag = 'scoped memory for tpu_custom_call.1']
    #allocation4 [shape = 'u8[131072]{0}', space=vmem, size = 0x20000, scoped, tag = 'input window, operand 1, single buffered']
    #allocation5 [shape = 's32[1]{0}', space=sflag, size = 0x4, scoped, tag = 'scoped memory for tpu_custom_call.1']
    %7 = vsyncpa [#allocation3], 0
    %8 = vsyncpa [#allocation5], 0
    // Predicated region
    $region2: #{tpu_custom_call.1} parent=1 // pred_check
      _
    $region3: #{tpu_custom_call.1} parent=1 // pred_check_branch
      %10 = sbr.rel (0) target = $region5
    $region4: #{tpu_custom_call.1} parent=1 // pred_region
      %s12 = ssub.s32 4096, 4096
      %13 = vsyncadd [#allocation3], %s12
      %s14 = sshll.u32 [#allocation2], 4
      %s15 = int_to_ptr.vmem [resolvable:$true] %s14
      %20 = dma.hbm_to_vmem [thread:$0]  %s0, 4096, %s15, [#allocation3], 256, 256, 16
    $region5: #{tpu_custom_call.1} parent=1 // pred_fallthru
      _
    // Predicated region
    $region6: #{tpu_custom_call.1} parent=1 // pred_check
      _
    $region7: #{tpu_custom_call.1} parent=1 // pred_check_branch
      %22 = sbr.rel (0) target = $region9
    $region8: #{tpu_custom_call.1} parent=1 // pred_region
      %s24 = ssub.s32 4096, 4096
      %25 = vsyncadd [#allocation5], %s24
      %s26 = sshll.u32 [#allocation4], 4
      %s27 = int_to_ptr.vmem [resolvable:$true] %s26
      %32 = dma.hbm_to_vmem [thread:$0]  %s1, 4096, %s27, [#allocation5], 256, 256, 16
    $region9: #{tpu_custom_call.1} parent=1 // pred_fallthru
      _
    // Predicated region
    $region10: #{tpu_custom_call.1} parent=1 // pred_check
      _
    $region11: #{tpu_custom_call.1} parent=1 // pred_check_branch
      %34 = sbr.rel (0) target = $region13
    $region12: #{tpu_custom_call.1} parent=1 // pred_region
      %35 = dma.done [#allocation3], 4096
    $region13: #{tpu_custom_call.1} parent=1 // pred_fallthru
      _
    // Predicated region
    $region14: #{tpu_custom_call.1} parent=1 // pred_check
      _
    $region15: #{tpu_custom_call.1} parent=1 // pred_check_branch
      %37 = sbr.rel (0) target = $region17
    $region16: #{tpu_custom_call.1} parent=1 // pred_region
      %38 = dma.done [#allocation5], 4096
    $region17: #{tpu_custom_call.1} parent=1 // pred_fallthru
      _
    %p39 = scmp.eq.s32.totalorder 0, 0
    // Predicated region
    $region18: #{tpu_custom_call.1} parent=1 // pred_check
      %p40 = pneg %p39
    $region19: #{tpu_custom_call.1} parent=1 // pred_check_branch
      %42 = sbr.rel (%p40) target = $region21
    $region20: #{tpu_custom_call.1} parent=1 // pred_region
      %vm43 = vcmask 7168
      %44 = vst.msk [vmem:[%s2] sm:$0xff] %vm43, 0.0
      %45 = vst.msk [vmem:[%s2 + $0x8] sm:$0xff] %vm43, 0.0
      %46 = vst.msk [vmem:[%s2 + $0x10] sm:$0xff] %vm43, 0.0
      %47 = vst.msk [vmem:[%s2 + $0x18] sm:$0xff] %vm43, 0.0
      %48 = vst.msk [vmem:[%s2 + $0x20] sm:$0xff] %vm43, 0.0
      %49 = vst.msk [vmem:[%s2 + $0x28] sm:$0xff] %vm43, 0.0
      %50 = vst.msk [vmem:[%s2 + $0x30] sm:$0xff] %vm43, 0.0
      %51 = vst.msk [vmem:[%s2 + $0x38] sm:$0xff] %vm43, 0.0
      %52 = vst.msk [vmem:[%s2 + $0x40] sm:$0xff] %vm43, 0.0
      %53 = vst.msk [vmem:[%s2 + $0x48] sm:$0xff] %vm43, 0.0
      %54 = vst.msk [vmem:[%s2 + $0x50] sm:$0xff] %vm43, 0.0
      %55 = vst.msk [vmem:[%s2 + $0x58] sm:$0xff] %vm43, 0.0
      %56 = vst.msk [vmem:[%s2 + $0x60] sm:$0xff] %vm43, 0.0
      %57 = vst.msk [vmem:[%s2 + $0x68] sm:$0xff] %vm43, 0.0
      %58 = vst.msk [vmem:[%s2 + $0x70] sm:$0xff] %vm43, 0.0
      %59 = vst.msk [vmem:[%s2 + $0x78] sm:$0xff] %vm43, 0.0
    $region21: #{tpu_custom_call.1} parent=1 // pred_fallthru
      _
    %v60 = vld [vmem:[#allocation2] sm:$0xff]
    %v61 = vld [vmem:[#allocation2 + $0x8] sm:$0xff]
    %v62 = vld [vmem:[#allocation2 + $0x10] sm:$0xff]
    %v63 = vld [vmem:[#allocation2 + $0x18] sm:$0xff]
    %v64 = vld [vmem:[#allocation2 + $0x20] sm:$0xff]
    %v65 = vld [vmem:[#allocation2 + $0x28] sm:$0xff]
    %v66 = vld [vmem:[#allocation2 + $0x30] sm:$0xff]
    %v67 = vld [vmem:[#allocation2 + $0x38] sm:$0xff]
    %v68 = vld [vmem:[#allocation2 + $0x40] sm:$0xff]
    %v69 = vld [vmem:[#allocation2 + $0x48] sm:$0xff]
    %v70 = vld [vmem:[#allocation2 + $0x50] sm:$0xff]
    %v71 = vld [vmem:[#allocation2 + $0x58] sm:$0xff]
    %v72 = vld [vmem:[#allocation2 + $0x60] sm:$0xff]
    %v73 = vld [vmem:[#allocation2 + $0x68] sm:$0xff]
    %v74 = vld [vmem:[#allocation2 + $0x70] sm:$0xff]
    %v75 = vld [vmem:[#allocation2 + $0x78] sm:$0xff]
    %v76 = vld [vmem:[#allocation2 + $0x80] sm:$0xff]
    %v77 = vld [vmem:[#allocation2 + $0x88] sm:$0xff]
    %v78 = vld [vmem:[#allocation2 + $0x90] sm:$0xff]
    %v79 = vld [vmem:[#allocation2 + $0x98] sm:$0xff]
    %v80 = vld [vmem:[#allocation2 + $0xa0] sm:$0xff]
    %v81 = vld [vmem:[#allocation2 + $0xa8] sm:$0xff]
    %v82 = vld [vmem:[#allocation2 + $0xb0] sm:$0xff]
    %v83 = vld [vmem:[#allocation2 + $0xb8] sm:$0xff]
    %v84 = vld [vmem:[#allocation2 + $0xc0] sm:$0xff]
    %v85 = vld [vmem:[#allocation2 + $0xc8] sm:$0xff]
    %v86 = vld [vmem:[#allocation2 + $0xd0] sm:$0xff]
    %v87 = vld [vmem:[#allocation2 + $0xd8] sm:$0xff]
    %v88 = vld [vmem:[#allocation2 + $0xe0] sm:$0xff]
    %v89 = vld [vmem:[#allocation2 + $0xe8] sm:$0xff]
    %v90 = vld [vmem:[#allocation2 + $0xf0] sm:$0xff]
    %v91 = vld [vmem:[#allocation2 + $0xf8] sm:$0xff]
    %v92 = vld [vmem:[#allocation4] sm:$0xff]
    %v93 = vld [vmem:[#allocation4 + $0x8] sm:$0xff]
    %v94 = vld [vmem:[#allocation4 + $0x10] sm:$0xff]
    %v95 = vld [vmem:[#allocation4 + $0x18] sm:$0xff]
    %v96 = vld [vmem:[#allocation4 + $0x20] sm:$0xff]
    %v97 = vld [vmem:[#allocation4 + $0x28] sm:$0xff]
    %v98 = vld [vmem:[#allocation4 + $0x30] sm:$0xff]
    %v99 = vld [vmem:[#allocation4 + $0x38] sm:$0xff]
    %v100 = vld [vmem:[#allocation4 + $0x40] sm:$0xff]
    %v101 = vld [vmem:[#allocation4 + $0x48] sm:$0xff]
    %v102 = vld [vmem:[#allocation4 + $0x50] sm:$0xff]
    %v103 = vld [vmem:[#allocation4 + $0x58] sm:$0xff]
    %v104 = vld [vmem:[#allocation4 + $0x60] sm:$0xff]
    %v105 = vld [vmem:[#allocation4 + $0x68] sm:$0xff]
    %v106 = vld [vmem:[#allocation4 + $0x70] sm:$0xff]
    %v107 = vld [vmem:[#allocation4 + $0x78] sm:$0xff]
    %v108 = vld [vmem:[#allocation4 + $0x80] sm:$0xff]
    %v109 = vld [vmem:[#allocation4 + $0x88] sm:$0xff]
    %v110 = vld [vmem:[#allocation4 + $0x90] sm:$0xff]
    %v111 = vld [vmem:[#allocation4 + $0x98] sm:$0xff]
    %v112 = vld [vmem:[#allocation4 + $0xa0] sm:$0xff]
    %v113 = vld [vmem:[#allocation4 + $0xa8] sm:$0xff]
    %v114 = vld [vmem:[#allocation4 + $0xb0] sm:$0xff]
    %v115 = vld [vmem:[#allocation4 + $0xb8] sm:$0xff]
    %v116 = vld [vmem:[#allocation4 + $0xc0] sm:$0xff]
    %v117 = vld [vmem:[#allocation4 + $0xc8] sm:$0xff]
    %v118 = vld [vmem:[#allocation4 + $0xd0] sm:$0xff]
    %v119 = vld [vmem:[#allocation4 + $0xd8] sm:$0xff]
    %v120 = vld [vmem:[#allocation4 + $0xe0] sm:$0xff]
    %v121 = vld [vmem:[#allocation4 + $0xe8] sm:$0xff]
    %v122 = vld [vmem:[#allocation4 + $0xf0] sm:$0xff]
    %v123 = vld [vmem:[#allocation4 + $0xf8] sm:$0xff]
    %124 = vmatprep.subr.mxu0 %v123
    %125 = vmatpush1.xpose.msra.mxu0 %v122
    %126 = vmatprep.subr.mxu0 %v121
    %127 = vmatpush1.xpose.msra.mxu0 %v120
    %128 = vmatprep.subr.mxu0 %v119
    %129 = vmatpush1.xpose.msra.mxu0 %v118
    %130 = vmatprep.subr.mxu0 %v117
    %131 = vmatpush1.xpose.msra.mxu0 %v116
    %132 = vmatprep.subr.mxu0 %v115
    %133 = vmatpush1.xpose.msra.mxu0 %v114
    %134 = vmatprep.subr.mxu0 %v113
    %135 = vmatpush1.xpose.msra.mxu0 %v112
    %136 = vmatprep.subr.mxu0 %v111
    %137 = vmatpush1.xpose.msra.mxu0 %v110
    %138 = vmatprep.subr.mxu0 %v109
    %139 = vmatpush1.xpose.msra.mxu0 %v108
    %140 = vmatprep.subr.mxu0 %v107
    %141 = vmatpush1.xpose.msra.mxu0 %v106
    %142 = vmatprep.subr.mxu0 %v105
    %143 = vmatpush1.xpose.msra.mxu0 %v104
    %144 = vmatprep.subr.mxu0 %v103
    %145 = vmatpush1.xpose.msra.mxu0 %v102
    %146 = vmatprep.subr.mxu0 %v101
    %147 = vmatpush1.xpose.msra.mxu0 %v100
    %148 = vmatprep.subr.mxu0 %v99
    %149 = vmatpush1.xpose.msra.mxu0 %v98
    %150 = vmatprep.subr.mxu0 %v97
    %151 = vmatpush1.xpose.msra.mxu0 %v96
    %152 = vmatprep.subr.mxu0 %v95
    %153 = vmatpush1.xpose.msra.mxu0 %v94
    %154 = vmatprep.subr.mxu0 %v93
    %155 = vmatpush1.xpose.msra.mxu0 %v92
    %156 = vmatprep.subr.mxu0 0.0
    %157 = vmatpush2.xpose.msra.mxu0 0.0
    %158 = vmatprep.subr.mxu0 0.0
    %159 = vmatpush2.xpose.msra.mxu0 0.0
    %160 = vmatprep.subr.mxu0 0.0
    %161 = vmatpush2.xpose.msra.mxu0 0.0
    %162 = vmatprep.subr.mxu0 0.0
    %163 = vmatpush2.xpose.msra.mxu0 0.0
    %164 = vmatprep.subr.mxu0 0.0
    %165 = vmatpush2.xpose.msra.mxu0 0.0
    %166 = vmatprep.subr.mxu0 0.0
    %167 = vmatpush2.xpose.msra.mxu0 0.0
    %168 = vmatprep.subr.mxu0 0.0
    %169 = vmatpush2.xpose.msra.mxu0 0.0
    %170 = vmatprep.subr.mxu0 0.0
    %171 = vmatpush2.xpose.msra.mxu0 0.0
    %172 = vmatprep.subr.mxu0 0.0
    %173 = vmatpush2.xpose.msra.mxu0 0.0
    %174 = vmatprep.subr.mxu0 0.0
    %175 = vmatpush2.xpose.msra.mxu0 0.0
    %176 = vmatprep.subr.mxu0 0.0
    %177 = vmatpush2.xpose.msra.mxu0 0.0
    %178 = vmatprep.subr.mxu0 0.0
    %179 = vmatpush2.xpose.msra.mxu0 0.0
    %180 = vmatprep.subr.mxu0 0.0
    %181 = vmatpush2.xpose.msra.mxu0 0.0
    %182 = vmatprep.subr.mxu0 0.0
    %183 = vmatpush2.xpose.msra.mxu0 0.0
    %184 = vmatprep.subr.mxu0 0.0
    %185 = vmatpush2.xpose.msra.mxu0 0.0
    %186 = vmatprep.subr.mxu0 0.0
    %187 = vmatpush2.xpose.msra.mxu0 0.0
    %188 = vmatprep.mubr.f32.mxu0 %v61
    %189 = vmatmul.mubr.f32.gmra.mxu0 %v60
    %v190 = vpop.f32.mrf.mxu0
    %v191 = vadd.f32 0.0, %v190
    %v192 = vpop.f32.mrf.mxu0
    %193 = vmatprep.mubr.f32.mxu0 %v63
    %194 = vmatmul.mubr.f32.gmra.mxu0 %v62
    %v195 = vpop.f32.mrf.mxu0
    %v196 = vadd.f32 0.0, %v195
    %v197 = vpop.f32.mrf.mxu0
    %198 = vmatprep.mubr.f32.mxu0 %v65
    %199 = vmatmul.mubr.f32.gmra.mxu0 %v64
    %v200 = vpop.f32.mrf.mxu0
    %v201 = vadd.f32 0.0, %v200
    %v202 = vpop.f32.mrf.mxu0
    %203 = vmatprep.mubr.f32.mxu0 %v67
    %204 = vmatmul.mubr.f32.gmra.mxu0 %v66
    %v205 = vpop.f32.mrf.mxu0
    %v206 = vadd.f32 0.0, %v205
    %v207 = vpop.f32.mrf.mxu0
    %208 = vmatprep.mubr.f32.mxu0 %v69
    %209 = vmatmul.mubr.f32.gmra.mxu0 %v68
    %v210 = vpop.f32.mrf.mxu0
    %v211 = vadd.f32 0.0, %v210
    %v212 = vpop.f32.mrf.mxu0
    %213 = vmatprep.mubr.f32.mxu0 %v71
    %214 = vmatmul.mubr.f32.gmra.mxu0 %v70
    %v215 = vpop.f32.mrf.mxu0
    %v216 = vadd.f32 0.0, %v215
    %v217 = vpop.f32.mrf.mxu0
    %218 = vmatprep.mubr.f32.mxu0 %v73
    %219 = vmatmul.mubr.f32.gmra.mxu0 %v72
    %v220 = vpop.f32.mrf.mxu0
    %v221 = vadd.f32 0.0, %v220
    %v222 = vpop.f32.mrf.mxu0
    %223 = vmatprep.mubr.f32.mxu0 %v75
    %224 = vmatmul.mubr.f32.gmra.mxu0 %v74
    %v225 = vpop.f32.mrf.mxu0
    %v226 = vadd.f32 0.0, %v225
    %v227 = vpop.f32.mrf.mxu0
    %228 = vmatprep.mubr.f32.mxu0 %v77
    %229 = vmatmul.mubr.f32.gmra.mxu0 %v76
    %v230 = vpop.f32.mrf.mxu0
    %v231 = vadd.f32 0.0, %v230
    %v232 = vpop.f32.mrf.mxu0
    %233 = vmatprep.mubr.f32.mxu0 %v79
    %234 = vmatmul.mubr.f32.gmra.mxu0 %v78
    %v235 = vpop.f32.mrf.mxu0
    %v236 = vadd.f32 0.0, %v235
    %v237 = vpop.f32.mrf.mxu0
    %238 = vmatprep.mubr.f32.mxu0 %v81
    %239 = vmatmul.mubr.f32.gmra.mxu0 %v80
    %v240 = vpop.f32.mrf.mxu0
    %v241 = vadd.f32 0.0, %v240
    %v242 = vpop.f32.mrf.mxu0
    %243 = vmatprep.mubr.f32.mxu0 %v83
    %244 = vmatmul.mubr.f32.gmra.mxu0 %v82
    %v245 = vpop.f32.mrf.mxu0
    %v246 = vadd.f32 0.0, %v245
    %v247 = vpop.f32.mrf.mxu0
    %248 = vmatprep.mubr.f32.mxu0 %v85
    %249 = vmatmul.mubr.f32.gmra.mxu0 %v84
    %v250 = vpop.f32.mrf.mxu0
    %v251 = vadd.f32 0.0, %v250
    %v252 = vpop.f32.mrf.mxu0
    %253 = vmatprep.mubr.f32.mxu0 %v87
    %254 = vmatmul.mubr.f32.gmra.mxu0 %v86
    %v255 = vpop.f32.mrf.mxu0
    %v256 = vadd.f32 0.0, %v255
    %v257 = vpop.f32.mrf.mxu0
    %258 = vmatprep.mubr.f32.mxu0 %v89
    %259 = vmatmul.mubr.f32.gmra.mxu0 %v88
    %v260 = vpop.f32.mrf.mxu0
    %v261 = vadd.f32 0.0, %v260
    %v262 = vpop.f32.mrf.mxu0
    %263 = vmatprep.mubr.f32.mxu0 %v91
    %264 = vmatmul.mubr.f32.gmra.mxu0 %v90
    %v265 = vpop.f32.mrf.mxu0
    %v266 = vadd.f32 0.0, %v265
    %v267 = vpop.f32.mrf.mxu0
    %268 = vdwg.mxu0
    %v269 = vld [vmem:[%s2] sm:$0xff]
    %v270 = vld [vmem:[%s2 + $0x8] sm:$0xff]
    %v271 = vld [vmem:[%s2 + $0x10] sm:$0xff]
    %v272 = vld [vmem:[%s2 + $0x18] sm:$0xff]
    %v273 = vld [vmem:[%s2 + $0x20] sm:$0xff]
    %v274 = vld [vmem:[%s2 + $0x28] sm:$0xff]
    %v275 = vld [vmem:[%s2 + $0x30] sm:$0xff]
    %v276 = vld [vmem:[%s2 + $0x38] sm:$0xff]
    %v277 = vld [vmem:[%s2 + $0x40] sm:$0xff]
    %v278 = vld [vmem:[%s2 + $0x48] sm:$0xff]
    %v279 = vld [vmem:[%s2 + $0x50] sm:$0xff]
    %v280 = vld [vmem:[%s2 + $0x58] sm:$0xff]
    %v281 = vld [vmem:[%s2 + $0x60] sm:$0xff]
    %v282 = vld [vmem:[%s2 + $0x68] sm:$0xff]
    %v283 = vld [vmem:[%s2 + $0x70] sm:$0xff]
    %v284 = vld [vmem:[%s2 + $0x78] sm:$0xff]
    %v285 = vsub.f32 %v191, 2.0
    %v286 = vsub.f32 %v196, 2.0
    %v287 = vsub.f32 %v201, 2.0
    %v288 = vsub.f32 %v206, 2.0
    %v289 = vsub.f32 %v211, 2.0
    %v290 = vsub.f32 %v216, 2.0
    %v291 = vsub.f32 %v221, 2.0
    %v292 = vsub.f32 %v226, 2.0
    %v293 = vsub.f32 %v231, 2.0
    %v294 = vsub.f32 %v236, 2.0
    %v295 = vsub.f32 %v241, 2.0
    %v296 = vsub.f32 %v246, 2.0
    %v297 = vsub.f32 %v251, 2.0
    %v298 = vsub.f32 %v256, 2.0
    %v299 = vsub.f32 %v261, 2.0
    %v300 = vsub.f32 %v266, 2.0
    %v301 = vmul.f32 %v285, 1.442695
    %v302 = vpow.pop %v301
    %v303 = vmul.f32 %v286, 1.442695
    %v304 = vpow.pop %v303
    %v305 = vmul.f32 %v287, 1.442695
    %v306 = vpow.pop %v305
    %v307 = vmul.f32 %v288, 1.442695
    %v308 = vpow.pop %v307
    %v309 = vmul.f32 %v289, 1.442695
    %v310 = vpow.pop %v309
    %v311 = vmul.f32 %v290, 1.442695
    %v312 = vpow.pop %v311
    %v313 = vmul.f32 %v291, 1.442695
    %v314 = vpow.pop %v313
    %v315 = vmul.f32 %v292, 1.442695
    %v316 = vpow.pop %v315
    %v317 = vmul.f32 %v293, 1.442695
    %v318 = vpow.pop %v317
    %v319 = vmul.f32 %v294, 1.442695
    %v320 = vpow.pop %v319
    %v321 = vmul.f32 %v295, 1.442695
    %v322 = vpow.pop %v321
    %v323 = vmul.f32 %v296, 1.442695
    %v324 = vpow.pop %v323
    %v325 = vmul.f32 %v297, 1.442695
    %v326 = vpow.pop %v325
    %v327 = vmul.f32 %v298, 1.442695
    %v328 = vpow.pop %v327
    %v329 = vmul.f32 %v299, 1.442695
    %v330 = vpow.pop %v329
    %v331 = vmul.f32 %v300, 1.442695
    %v332 = vpow.pop %v331
    %333 = vadd.xlane.f32.xlu0 %v302
    %v334 = vpop.xlane.xlu0 %333
    %335 = vadd.xlane.f32.xlu0 %v304
    %v336 = vpop.xlane.xlu0 %335
    %337 = vadd.xlane.f32.xlu0 %v306
    %v338 = vpop.xlane.xlu0 %337
    %339 = vadd.xlane.f32.xlu0 %v308
    %v340 = vpop.xlane.xlu0 %339
    %341 = vadd.xlane.f32.xlu0 %v310
    %v342 = vpop.xlane.xlu0 %341
    %343 = vadd.xlane.f32.xlu0 %v312
    %v344 = vpop.xlane.xlu0 %343
    %345 = vadd.xlane.f32.xlu0 %v314
    %v346 = vpop.xlane.xlu0 %345
    %347 = vadd.xlane.f32.xlu0 %v316
    %v348 = vpop.xlane.xlu0 %347
    %349 = vadd.xlane.f32.xlu0 %v318
    %v350 = vpop.xlane.xlu0 %349
    %351 = vadd.xlane.f32.xlu0 %v320
    %v352 = vpop.xlane.xlu0 %351
    %353 = vadd.xlane.f32.xlu0 %v322
    %v354 = vpop.xlane.xlu0 %353
    %355 = vadd.xlane.f32.xlu0 %v324
    %v356 = vpop.xlane.xlu0 %355
    %357 = vadd.xlane.f32.xlu0 %v326
    %v358 = vpop.xlane.xlu0 %357
    %359 = vadd.xlane.f32.xlu0 %v328
    %v360 = vpop.xlane.xlu0 %359
    %361 = vadd.xlane.f32.xlu0 %v330
    %v362 = vpop.xlane.xlu0 %361
    %363 = vadd.xlane.f32.xlu0 %v332
    %v364 = vpop.xlane.xlu0 %363
    %v365 = vadd.f32 %v269, %v334
    %v366 = vadd.f32 %v270, %v336
    %v367 = vadd.f32 %v271, %v338
    %v368 = vadd.f32 %v272, %v340
    %v369 = vadd.f32 %v273, %v342
    %v370 = vadd.f32 %v274, %v344
    %v371 = vadd.f32 %v275, %v346
    %v372 = vadd.f32 %v276, %v348
    %v373 = vadd.f32 %v277, %v350
    %v374 = vadd.f32 %v278, %v352
    %v375 = vadd.f32 %v279, %v354
    %v376 = vadd.f32 %v280, %v356
    %v377 = vadd.f32 %v281, %v358
    %v378 = vadd.f32 %v282, %v360
    %v379 = vadd.f32 %v283, %v362
    %v380 = vadd.f32 %v284, %v364
    %vm381 = vcmask 7168
    %382 = vst.msk [vmem:[%s2] sm:$0xff] %vm381, %v365
    %383 = vst.msk [vmem:[%s2 + $0x8] sm:$0xff] %vm381, %v366
    %384 = vst.msk [vmem:[%s2 + $0x10] sm:$0xff] %vm381, %v367
    %385 = vst.msk [vmem:[%s2 + $0x18] sm:$0xff] %vm381, %v368
    %386 = vst.msk [vmem:[%s2 + $0x20] sm:$0xff] %vm381, %v369
    %387 = vst.msk [vmem:[%s2 + $0x28] sm:$0xff] %vm381, %v370
    %388 = vst.msk [vmem:[%s2 + $0x30] sm:$0xff] %vm381, %v371
    %389 = vst.msk [vmem:[%s2 + $0x38] sm:$0xff] %vm381, %v372
    %390 = vst.msk [vmem:[%s2 + $0x40] sm:$0xff] %vm381, %v373
    %391 = vst.msk [vmem:[%s2 + $0x48] sm:$0xff] %vm381, %v374
    %392 = vst.msk [vmem:[%s2 + $0x50] sm:$0xff] %vm381, %v375
    %393 = vst.msk [vmem:[%s2 + $0x58] sm:$0xff] %vm381, %v376
    %394 = vst.msk [vmem:[%s2 + $0x60] sm:$0xff] %vm381, %v377
    %395 = vst.msk [vmem:[%s2 + $0x68] sm:$0xff] %vm381, %v378
    %396 = vst.msk [vmem:[%s2 + $0x70] sm:$0xff] %vm381, %v379
    %397 = vst.msk [vmem:[%s2 + $0x78] sm:$0xff] %vm381, %v380
    // Predicated region
    $region22: #{tpu_custom_call.1} parent=1 // pred_check
      _
    $region23: #{tpu_custom_call.1} parent=1 // pred_check_branch
      %399 = sbr.rel (0) target = $region25
    $region24: #{tpu_custom_call.1} parent=1 // pred_region
      _
    $region25: #{tpu_custom_call.1} parent=1 // pred_fallthru
      _
    // Predicated region
    $region26: #{tpu_custom_call.1} parent=1 // pred_check
      _
    $region27: #{tpu_custom_call.1} parent=1 // pred_check_branch
      %401 = sbr.rel (0) target = $region29
    $region28: #{tpu_custom_call.1} parent=1 // pred_region
      _
    $region29: #{tpu_custom_call.1} parent=1 // pred_fallthru
      _
    %402 = vsyncpa [#allocation3], 1
    %403 = vsyncpa [#allocation5], 1

</llo_original>
